<compile_context>
chip_gen: v7x
topology: tpu7x:2x2x1
jax: 0.10.0
libtpu: 0.0.40
codegen_flags: <defaults>
</compile_context>

<pallas_src>
import jax
import jax.numpy as jnp
from jax.experimental import pallas as pl
from jax.experimental.pallas import tpu as pltpu


def _round_up(x, m):
    return (x + m - 1) // m * m


def nn1_kernel(x_ref, w1_ref, b1_ref, w2_ref, b2_ref, w34_ref, bo_ref, out_ref):
    # All matmuls are bf16 x bf16 with f32 accumulation (MXU fast path).
    x = x_ref[...]                                          # bf16 (tile_b, in_pad)
    # layer 0: Linear(inputDim -> 256[=pad(220)]) + ReLU
    h = jnp.dot(x, w1_ref[...], preferred_element_type=jnp.float32)
    h = jnp.maximum(h + b1_ref[...], 0.0)
    # layer 1: Linear(256 -> 256[=pad(180)]) + ReLU
    h = jnp.dot(h.astype(jnp.bfloat16), w2_ref[...],
                preferred_element_type=jnp.float32)
    h = jnp.maximum(h + b2_ref[...], 0.0)
    # fused layer 2 + output projection: (h @ w3 + b3) @ wo + bo == h @ (w3@wo) + bo'
    out_ref[...] = (jnp.dot(h.astype(jnp.bfloat16), w34_ref[...],
                            preferred_element_type=jnp.float32)
                    + bo_ref[...])


def pack_params(params, n_tokens):
    """Pad to lane-aligned shapes, fuse w3@wo and fold b3 into bo, bf16 weights."""
    w1, b1, w2, b2, w3, b3, wo, bo = params
    in_dim, h1 = w1.shape
    h2 = w2.shape[1]

    in_p = _round_up(in_dim, 128)
    h1_p = _round_up(h1, 128)       # 220 -> 256
    h2_p = _round_up(h2, 128)       # 180 -> 256
    nt_p = _round_up(n_tokens, 128)

    def pad2(a, rows, cols):
        return jnp.pad(a, ((0, rows - a.shape[0]), (0, cols - a.shape[1])))

    # Fuse the last two linear layers (no nonlinearity between them):
    #   (h @ w3 + b3) @ wo + bo  ==  h @ (w3 @ wo) + (b3 @ wo + bo)
    w34 = (w3 @ wo)                 # f32 fuse, then quantize once to bf16
    bo_fused = b3 @ wo + bo

    w1_p = pad2(w1, in_p, h1_p).astype(jnp.bfloat16)
    b1_p = pad2(b1, 1, h1_p).astype(jnp.float32)
    w2_p = pad2(w2, h1_p, h2_p).astype(jnp.bfloat16)
    b2_p = pad2(b2, 1, h2_p).astype(jnp.float32)
    w34_p = pad2(w34, h2_p, nt_p).astype(jnp.bfloat16)
    bo_p = pad2(bo_fused, 1, nt_p).astype(jnp.float32)

    return dict(w1=w1_p, b1=b1_p, w2=w2_p, b2=b2_p, w34=w34_p, bo=bo_p,
                in_dim=in_dim, in_pad=in_p, n_tokens=n_tokens, nt_pad=nt_p)


def nn1_forward(x0, packed, *, tile_b=2048):
    """x0: (ctxLen, emb) -> (nTokens,), or (B, ctxLen, emb) -> (B, nTokens)."""
    squeeze = (x0.ndim == 2)
    if squeeze:
        x0 = x0[None]
    b = x0.shape[0]
    # Stream activations in bf16 (only per-step DMA'd input).
    x = x0.reshape(b, -1).astype(jnp.bfloat16)

    in_dim, in_pad = packed["in_dim"], packed["in_pad"]
    nt, nt_pad = packed["n_tokens"], packed["nt_pad"]
    assert x.shape[1] == in_dim

    tile_b = max(8, min(tile_b, _round_up(b, 8)))
    b_pad = _round_up(b, tile_b)
    x = jnp.pad(x, ((0, b_pad - b), (0, in_pad - in_dim)))
    n_b_tiles = b_pad // tile_b

    # v7x has 2 TensorCores: if the batch axis collapses to one tile, split the
    # output columns so there are >=2 parallel grid slices (hidden recompute per
    # column tile is negligible at that size). No effect on v5e/v6e (1 TC).
    if n_b_tiles >= 2 or nt_pad % 256 != 0:
        tile_n = nt_pad
    else:
        tile_n = nt_pad // 2
    n_n_tiles = nt_pad // tile_n

    w1, b1, w2, b2, w34, bo = (packed[k] for k in
                               ("w1", "b1", "w2", "b2", "w34", "bo"))
    h1_p, h2_p = w1.shape[1], w2.shape[1]

    flops = 2 * b_pad * (n_n_tiles * (in_pad * h1_p + h1_p * h2_p)
                         + h2_p * nt_pad)
    bytes_accessed = (x.size * x.dtype.itemsize + b_pad * nt_pad * 4
                      + sum(int(a.size) * a.dtype.itemsize
                            for a in (w1, b1, w2, b2, w34, bo)))

    def resident(a):
        # Full-array block with a constant index_map: DMA'd once, VMEM-resident
        # across every grid step (only the activation/output blocks stream).
        return pl.BlockSpec(a.shape, lambda i, j: (0, 0))

    out = pl.pallas_call(
        nn1_kernel,
        out_shape=jax.ShapeDtypeStruct((b_pad, nt_pad), jnp.float32),
        grid=(n_b_tiles, n_n_tiles),
        in_specs=[pl.BlockSpec((tile_b, in_pad), lambda i, j: (i, 0)),
                  resident(w1), resident(b1), resident(w2), resident(b2),
                  pl.BlockSpec((h2_p, tile_n), lambda i, j: (0, j)),
                  pl.BlockSpec((1, tile_n), lambda i, j: (0, j))],
        out_specs=pl.BlockSpec((tile_b, tile_n), lambda i, j: (i, j)),
        compiler_params=pltpu.CompilerParams(
            dimension_semantics=("parallel", "parallel")),
        cost_estimate=pl.CostEstimate(flops=flops, transcendentals=0,
                                      bytes_accessed=bytes_accessed),
    )(x, w1, b1, w2, b2, w34, bo)

    out = out[:b, :nt]
    return out[0] if squeeze else out


def init_params(key, n_tokens, ctx_len, embedding_dim):
    """Deterministic init mimicking the PyTorch module's __init__ shapes."""
    input_dim = ctx_len * embedding_dim
    dims = [input_dim, 220, 180, embedding_dim]
    keys = jax.random.split(key, 2 * (len(dims) - 1) + 2)

    params = []
    ki = 0
    for i in range(len(dims) - 1):
        fan_in, fan_out = dims[i], dims[i + 1]
        bound = 1.0 / jnp.sqrt(fan_in)
        # stored as (in, out) -> kernel does row @ W (transpose of torch layout)
        w = jax.random.uniform(keys[ki], (fan_in, fan_out), jnp.float32,
                               -bound, bound)
        b = jax.random.uniform(keys[ki + 1], (1, fan_out), jnp.float32,
                               -bound, bound)
        params += [w, b]
        ki += 2

    # contextVecToProbabilityVec: rand(emb, nTokens) * 0.05
    wo = jax.random.uniform(keys[ki], (embedding_dim, n_tokens), jnp.float32,
                            0.0, 1.0) * 0.05
    # contextVecToProbabilityVecBias: rand(nTokens) * 0.005
    bo = jax.random.uniform(keys[ki + 1], (1, n_tokens), jnp.float32,
                            0.0, 1.0) * 0.005
    params += [wo, bo]
    # NOTE: self.inputEmbeddings is unused in Nn1.forward, so it is omitted.
    return tuple(params)


def nn1_reference(x0, params):
    """Pure-JAX reference modelling the same bf16 quantization/fusion as the kernel."""
    w1, b1, w2, b2, w3, b3, wo, bo = params
    bf = lambda a: a.astype(jnp.bfloat16)
    w34 = w3 @ wo
    bo_fused = b3 @ wo + bo
    t = x0.reshape(1, -1)
    t = jnp.maximum(jnp.dot(bf(t), bf(w1),
                            preferred_element_type=jnp.float32) + b1, 0.0)
    t = jnp.maximum(jnp.dot(bf(t), bf(w2),
                            preferred_element_type=jnp.float32) + b2, 0.0)
    t = jnp.dot(bf(t), bf(w34), preferred_element_type=jnp.float32) + bo_fused
    return jnp.squeeze(t, axis=0)


if __name__ == "__main__":
    n_tokens, ctx_len, embedding_dim = 256, 8, 32

    key = jax.random.PRNGKey(0)
    k_params, k_x, k_xb = jax.random.split(key, 3)
    params = init_params(k_params, n_tokens, ctx_len, embedding_dim)
    packed = pack_params(params, n_tokens)

    # Single context, exactly the torch module's forward signature.
    x0 = jax.random.normal(k_x, (ctx_len, embedding_dim), jnp.float32)
    out = jax.block_until_ready(nn1_forward(x0, packed))
    ref = nn1_reference(x0, params)
    assert out.shape == (n_tokens,)
    assert jnp.allclose(out, ref, atol=2e-3, rtol=2e-3), \
        float(jnp.max(jnp.abs(out - ref)))

    # Small batch exercising the gridded path (weights stay VMEM-resident).
    bsz = 16
    xb = jax.random.normal(k_xb, (bsz, ctx_len, embedding_dim), jnp.float32)
    outb = jax.block_until_ready(nn1_forward(xb, packed))
    refb = jax.vmap(lambda xx: nn1_reference(xx, params))(xb)
    assert outb.shape == (bsz, n_tokens)
    assert jnp.allclose(outb, refb, atol=2e-3, rtol=2e-3), \
        float(jnp.max(jnp.abs(outb - refb)))

    print("KERNEL_OK")
</pallas_src>

<mosaic_0001>
module attributes {stable_mosaic.version = 11 : i64} {
  func.func @nn1_kernel(%arg0: i32, %arg1: i32, %arg2: memref<8x256xbf16, #tpu.memory_space<vmem>>, %arg3: memref<256x256xbf16, #tpu.memory_space<vmem>>, %arg4: memref<1x256xf32, #tpu.memory_space<vmem>>, %arg5: memref<256x256xbf16, #tpu.memory_space<vmem>>, %arg6: memref<1x256xf32, #tpu.memory_space<vmem>>, %arg7: memref<256x128xbf16, #tpu.memory_space<vmem>>, %arg8: memref<1x128xf32, #tpu.memory_space<vmem>>, %arg9: memref<8x128xf32, #tpu.memory_space<vmem>>) attributes {dimension_semantics = [#tpu.dimension_semantics<parallel>, #tpu.dimension_semantics<parallel>], iteration_bounds = array<i64: 1, 2>, scalar_prefetch = 0 : i64, scratch_operands = 0 : i64, tpu.core_type = #tpu.core_type<tc>, window_params = [{transform_indices = @transform_0, window_bounds = array<i64: 8, 256>}, {pipeline_mode = #tpu.pipeline_mode<synchronous>, transform_indices = @transform_1, window_bounds = array<i64: 256, 256>}, {pipeline_mode = #tpu.pipeline_mode<synchronous>, transform_indices = @transform_2, window_bounds = array<i64: 1, 256>}, {pipeline_mode = #tpu.pipeline_mode<synchronous>, transform_indices = @transform_3, window_bounds = array<i64: 256, 256>}, {pipeline_mode = #tpu.pipeline_mode<synchronous>, transform_indices = @transform_4, window_bounds = array<i64: 1, 256>}, {transform_indices = @transform_5, window_bounds = array<i64: 256, 128>}, {transform_indices = @transform_6, window_bounds = array<i64: 1, 128>}, {transform_indices = @transform_7, window_bounds = array<i64: 8, 128>}]} {
    %c0 = arith.constant 0 : index
    %c0_0 = arith.constant 0 : index
    %0 = vector.load %arg2[%c0, %c0_0] : memref<8x256xbf16, #tpu.memory_space<vmem>>, vector<8x256xbf16>
    %c0_1 = arith.constant 0 : index
    %c0_2 = arith.constant 0 : index
    %1 = vector.load %arg3[%c0_1, %c0_2] : memref<256x256xbf16, #tpu.memory_space<vmem>>, vector<256x256xbf16>
    %cst = arith.constant dense<0.000000e+00> : vector<8x256xf32>
    %2 = tpu.matmul %0, %1, %cst {dimension_numbers = #tpu.dot_dimension_numbers<[1], [0], [0], [1], [0, 0, 1, 1], [], []>} : vector<8x256xbf16>, vector<256x256xbf16>, vector<8x256xf32> -> vector<8x256xf32>
    %c0_3 = arith.constant 0 : index
    %c0_4 = arith.constant 0 : index
    %3 = vector.load %arg4[%c0_3, %c0_4] : memref<1x256xf32, #tpu.memory_space<vmem>>, vector<1x256xf32>
    %4 = vector.broadcast %3 : vector<1x256xf32> to vector<8x256xf32>
    %5 = arith.addf %2, %4 : vector<8x256xf32>
    %cst_5 = arith.constant 0.000000e+00 : f32
    %6 = vector.broadcast %cst_5 : f32 to vector<8x256xf32>
    %7 = arith.maximumf %5, %6 : vector<8x256xf32>
    %8 = arith.truncf %7 : vector<8x256xf32> to vector<8x256xbf16>
    %c0_6 = arith.constant 0 : index
    %c0_7 = arith.constant 0 : index
    %9 = vector.load %arg5[%c0_6, %c0_7] : memref<256x256xbf16, #tpu.memory_space<vmem>>, vector<256x256xbf16>
    %cst_8 = arith.constant dense<0.000000e+00> : vector<8x256xf32>
    %10 = tpu.matmul %8, %9, %cst_8 {dimension_numbers = #tpu.dot_dimension_numbers<[1], [0], [0], [1], [0, 0, 1, 1], [], []>} : vector<8x256xbf16>, vector<256x256xbf16>, vector<8x256xf32> -> vector<8x256xf32>
    %c0_9 = arith.constant 0 : index
    %c0_10 = arith.constant 0 : index
    %11 = vector.load %arg6[%c0_9, %c0_10] : memref<1x256xf32, #tpu.memory_space<vmem>>, vector<1x256xf32>
    %12 = vector.broadcast %11 : vector<1x256xf32> to vector<8x256xf32>
    %13 = arith.addf %10, %12 : vector<8x256xf32>
    %cst_11 = arith.constant 0.000000e+00 : f32
    %14 = vector.broadcast %cst_11 : f32 to vector<8x256xf32>
    %15 = arith.maximumf %13, %14 : vector<8x256xf32>
    %16 = arith.truncf %15 : vector<8x256xf32> to vector<8x256xbf16>
    %c0_12 = arith.constant 0 : index
    %c0_13 = arith.constant 0 : index
    %17 = vector.load %arg7[%c0_12, %c0_13] : memref<256x128xbf16, #tpu.memory_space<vmem>>, vector<256x128xbf16>
    %cst_14 = arith.constant dense<0.000000e+00> : vector<8x128xf32>
    %18 = tpu.matmul %16, %17, %cst_14 {dimension_numbers = #tpu.dot_dimension_numbers<[1], [0], [0], [1], [0, 0, 1, 1], [], []>} : vector<8x256xbf16>, vector<256x128xbf16>, vector<8x128xf32> -> vector<8x128xf32>
    %c0_15 = arith.constant 0 : index
    %c0_16 = arith.constant 0 : index
    %19 = vector.load %arg8[%c0_15, %c0_16] : memref<1x128xf32, #tpu.memory_space<vmem>>, vector<1x128xf32>
    %20 = vector.broadcast %19 : vector<1x128xf32> to vector<8x128xf32>
    %21 = arith.addf %18, %20 : vector<8x128xf32>
    %c0_17 = arith.constant 0 : index
    %c0_18 = arith.constant 0 : index
    %22 = vector.load %arg9[%c0_17, %c0_18] : memref<8x128xf32, #tpu.memory_space<vmem>>, vector<8x128xf32>
    tpu.vector_store %arg9[%c0_17, %c0_18], %21 {strides = array<i32>} : memref<8x128xf32, #tpu.memory_space<vmem>>, vector<8x128xf32>,
    return
  }
  func.func @transform_0(%arg0: i32, %arg1: i32) -> (i32, i32) {
    %c0_i32 = arith.constant 0 : i32
    %c0_i32_0 = arith.constant 0 : i32
    return %arg0, %c0_i32 : i32, i32
  }
  func.func @transform_1(%arg0: i32, %arg1: i32) -> (i32, i32) {
    %c0_i32 = arith.constant 0 : i32
    %c0_i32_0 = arith.constant 0 : i32
    %c0_i32_1 = arith.constant 0 : i32
    return %c0_i32, %c0_i32_0 : i32, i32
  }
  func.func @transform_2(%arg0: i32, %arg1: i32) -> (i32, i32) {
    %c0_i32 = arith.constant 0 : i32
    %c0_i32_0 = arith.constant 0 : i32
    %c0_i32_1 = arith.constant 0 : i32
    return %c0_i32, %c0_i32_0 : i32, i32
  }
  func.func @transform_3(%arg0: i32, %arg1: i32) -> (i32, i32) {
    %c0_i32 = arith.constant 0 : i32
    %c0_i32_0 = arith.constant 0 : i32
    %c0_i32_1 = arith.constant 0 : i32
    return %c0_i32, %c0_i32_0 : i32, i32
  }
  func.func @transform_4(%arg0: i32, %arg1: i32) -> (i32, i32) {
    %c0_i32 = arith.constant 0 : i32
    %c0_i32_0 = arith.constant 0 : i32
    %c0_i32_1 = arith.constant 0 : i32
    return %c0_i32, %c0_i32_0 : i32, i32
  }
  func.func @transform_5(%arg0: i32, %arg1: i32) -> (i32, i32) {
    %c0_i32 = arith.constant 0 : i32
    %c0_i32_0 = arith.constant 0 : i32
    return %c0_i32, %arg1 : i32, i32
  }
  func.func @transform_6(%arg0: i32, %arg1: i32) -> (i32, i32) {
    %c0_i32 = arith.constant 0 : i32
    %c0_i32_0 = arith.constant 0 : i32
    return %c0_i32, %arg1 : i32, i32
  }
  func.func @transform_7(%arg0: i32, %arg1: i32) -> (i32, i32) {
    %c0_i32 = arith.constant 0 : i32
    return %arg0, %arg1 : i32, i32
  }
}

</mosaic_0001>

<llo_original>
// kernel: tpu_custom_call.1
$region0: #{tpu_custom_call.1}
  #allocation0 [shape = 'u32[]', space=smem, size = 0x4, offset = 0x4, fixed_abs, tag = 'smem constant byte address 0x4 - core index']
  #allocation1 [shape = 'u32[144,128]{1,0:T(1,128)}', space=vmem, size = 0x12000, scoped, tag = 'internal scratch']
  %s0 = inlined_call_operand.hbm [shape: bf16[8,256], index: 0, kind: input, shape index: {}]
  %s1 = inlined_call_operand.hbm [shape: bf16[256,256], index: 1, kind: input, shape index: {}]
  %s2 = inlined_call_operand.vmem [shape: f32[1,256], index: 2, kind: input, shape index: {}]
  %s3 = inlined_call_operand.hbm [shape: bf16[256,256], index: 3, kind: input, shape index: {}]
  %s4 = inlined_call_operand.vmem [shape: f32[1,256], index: 4, kind: input, shape index: {}]
  %s5 = inlined_call_operand.hbm [shape: bf16[256,256], index: 5, kind: input, shape index: {}]
  %s6 = inlined_call_operand.vmem [shape: f32[1,256], index: 6, kind: input, shape index: {}]
  %s7 = inlined_call_operand.hbm [shape: f32[8,256], index: 7, kind: output, shape index: {}]
  %s8 = sld [smem:[#allocation0]]
  $region77: #{tpu_custom_call.1} parent=0
    _
  %s10 = ssub.s32 1, %s8
  %s11 = scalar_select 0, %s10, %s8
  $region1: #{tpu_custom_call.1} parent=0
    #allocation2 [shape = 'u8[4096]{0}', space=vmem, size = 0x1000, scoped, tag = 'input window, operand 0, single buffered']
    #allocation3 [shape = 's32[2]{0}', space=sflag, size = 0x8, scoped, tag = 'scoped memory for tpu_custom_call.1']
    #allocation4 [shape = 's32[2]{0}', space=sflag, size = 0x8, scoped, tag = 'scoped memory for tpu_custom_call.1']
    #allocation5 [shape = 'u8[131072]{0}', space=vmem, size = 0x20000, scoped, tag = 'input window, operand 1, single buffered']
    #allocation6 [shape = 's32[1]{0}', space=sflag, size = 0x4, scoped, tag = 'scoped memory for tpu_custom_call.1']
    #allocation7 [shape = 'u8[131072]{0}', space=vmem, size = 0x20000, scoped, tag = 'input window, operand 3, single buffered']
    #allocation8 [shape = 'u8[131072]{0}', space=vmem, size = 0x20000, scoped, tag = 'input window, operand 5']
    #allocation9 [shape = 's32[2]{0}', space=sflag, size = 0x8, scoped, tag = 'scoped memory for tpu_custom_call.1']
    #allocation10 [shape = 'u8[8192]{0}', space=vmem, size = 0x2000, scoped, tag = 'output window, operand 0']
    %12 = vsyncpa [#allocation3], 0
    %13 = vsyncpa [#allocation6], 0
    %14 = vsyncpa [#allocation9], 0
    %s15 = scalar_lea.sflag [#allocation9], 1
    %16 = vsyncpa %s15, 0
    %17 = vsyncpa [#allocation4], 0
    %s18 = scalar_lea.sflag [#allocation4], 1
    %19 = vsyncpa %s18, 0
    loop: start=0, step=1, limit=4
    $region2: #{tpu_custom_call.1} parent=1 // loop_pre_header
      _
    $region3: #{tpu_custom_call.1} parent=1 // loop_header
      %s21 = sphi 0, %s25
      %p22 = scmp.ge.s32.totalorder %s21, 4
      %s28 = sphi 0, %s40
      %s29 = sphi 0, %s36
      %s30 = sphi 0, %s28
      %s31 = sphi 0, %s29
      %s32 = sphi 0, %s30
      %s33 = sphi 0, %s31
      %s43 = sphi 0, %s45
      %s46 = sphi 0, %s43
      %s47 = sphi 0, %s46
      %s63 = sphi 0, %s47
      %s67 = sphi 0, %s67
      %s69 = sphi 0, %s67
      %s70 = sphi 0, %s69
      %s84 = sphi 0, %s70
      %s88 = sphi 0, %s88
      %s90 = sphi 0, %s88
      %s91 = sphi 0, %s90
      %s105 = sphi 0, %s91
      %s109 = sphi 0, %s109
      %s111 = sphi 0, %s109
      %s112 = sphi 0, %s111
      %s126 = sphi 0, %s112
      %s130 = sphi 0, %s130
      %s132 = sphi 0, %s130
      %s133 = sphi 0, %s132
      %s147 = sphi 0, %s133
      %s153 = sphi 0, %s155
      %s156 = sphi 0, %s153
      %s157 = sphi 0, %s156
      %s173 = sphi 0, %s157
      %s179 = sphi 0, %s181
      %s182 = sphi 0, %s179
      %s183 = sphi 0, %s182
      %s199 = sphi 0, %s183
      %s207 = sphi 0, %s209
      %s210 = sphi 0, %s207
      %s211 = sphi 0, %s210
      %s227 = sphi 0, %s211
    $region4: #{tpu_custom_call.1} parent=1 // loop_header_branch
      %24 = sbr.rel (%p22) target = $region8
    $region5: #{tpu_custom_call.1} parent=1 // loop_body
      %s26 = ssub.s32 %s21, 1
      %s27 = ssub.s32 %s21, 2
      %s34 = sadd.s32 1, %s29
      %p35 = scmp.ge.s32.totalorder %s34, 2
      %s36 = scalar_select %p35, 0, %s34
      %s37 = sadd.s32 1, %s28
      %s38 = scalar_select %p35, %s37, %s28
      %p39 = scmp.ge.s32.totalorder %s38, 1
      %s40 = scalar_select %p39, 0, %s38
      %s41 = ssub.s32 %s28, %s40
      %p42 = scmp.eq.s32.totalorder %s41, 0
      %s44 = sadd.s32 %s43, 1
      %s45 = scalar_select %p42, %s43, %s44
      %p48 = pneg %p42
      %p49 = scmp.eq.s32.totalorder %s21, 1
      %p50 = por %p48, %p49
      %p51 = scmp.ne.s32.totalorder %s43, %s46
      %p52 = scmp.eq.s32.totalorder %s21, 0
      %p53 = por %p51, %p52
      %p54 = scmp.ne.s32.totalorder %s43, %s46
      %p55 = scmp.eq.s32.totalorder %s26, 1
      %p56 = por %p54, %p55
      %p57 = scmp.ne.s32.totalorder %s46, %s47
      %p58 = scmp.eq.s32.totalorder %s26, 0
      %p59 = por %p57, %p58
      %p60 = scmp.ne.s32.totalorder %s46, %s47
      %p61 = scmp.eq.s32.totalorder %s27, 1
      %p62 = por %p60, %p61
      %p64 = scmp.ne.s32.totalorder %s47, %s63
      %p65 = scmp.eq.s32.totalorder %s27, 0
      %p66 = por %p64, %p65
      %s68 = sadd.s32 %s67, 1
      %p71 = scmp.eq.s32.totalorder %s21, 1
      %p72 = scmp.ne.s32.totalorder %s67, %s69
      %p73 = scmp.eq.s32.totalorder %s21, 0
      %p74 = por %p72, %p73
      %p75 = scmp.ne.s32.totalorder %s67, %s69
      %p76 = scmp.eq.s32.totalorder %s26, 1
      %p77 = por %p75, %p76
      %p78 = scmp.ne.s32.totalorder %s69, %s70
      %p79 = scmp.eq.s32.totalorder %s26, 0
      %p80 = por %p78, %p79
      %p81 = scmp.ne.s32.totalorder %s69, %s70
      %p82 = scmp.eq.s32.totalorder %s27, 1
      %p83 = por %p81, %p82
      %p85 = scmp.ne.s32.totalorder %s70, %s84
      %p86 = scmp.eq.s32.totalorder %s27, 0
      %p87 = por %p85, %p86
      %s89 = sadd.s32 %s88, 1
      %p92 = scmp.eq.s32.totalorder %s21, 1
      %p93 = scmp.ne.s32.totalorder %s88, %s90
      %p94 = scmp.eq.s32.totalorder %s21, 0
      %p95 = por %p93, %p94
      %p96 = scmp.ne.s32.totalorder %s88, %s90
      %p97 = scmp.eq.s32.totalorder %s26, 1
      %p98 = por %p96, %p97
      %p99 = scmp.ne.s32.totalorder %s90, %s91
      %p100 = scmp.eq.s32.totalorder %s26, 0
      %p101 = por %p99, %p100
      %p102 = scmp.ne.s32.totalorder %s90, %s91
      %p103 = scmp.eq.s32.totalorder %s27, 1
      %p104 = por %p102, %p103
      %p106 = scmp.ne.s32.totalorder %s91, %s105
      %p107 = scmp.eq.s32.totalorder %s27, 0
      %p108 = por %p106, %p107
      %s110 = sadd.s32 %s109, 1
      %p113 = scmp.eq.s32.totalorder %s21, 1
      %p114 = scmp.ne.s32.totalorder %s109, %s111
      %p115 = scmp.eq.s32.totalorder %s21, 0
      %p116 = por %p114, %p115
      %p117 = scmp.ne.s32.totalorder %s109, %s111
      %p118 = scmp.eq.s32.totalorder %s26, 1
      %p119 = por %p117, %p118
      %p120 = scmp.ne.s32.totalorder %s111, %s112
      %p121 = scmp.eq.s32.totalorder %s26, 0
      %p122 = por %p120, %p121
      %p123 = scmp.ne.s32.totalorder %s111, %s112
      %p124 = scmp.eq.s32.totalorder %s27, 1
      %p125 = por %p123, %p124
      %p127 = scmp.ne.s32.totalorder %s112, %s126
      %p128 = scmp.eq.s32.totalorder %s27, 0
      %p129 = por %p127, %p128
      %s131 = sadd.s32 %s130, 1
      %p134 = scmp.eq.s32.totalorder %s21, 1
      %p135 = scmp.ne.s32.totalorder %s130, %s132
      %p136 = scmp.eq.s32.totalorder %s21, 0
      %p137 = por %p135, %p136
      %p138 = scmp.ne.s32.totalorder %s130, %s132
      %p139 = scmp.eq.s32.totalorder %s26, 1
      %p140 = por %p138, %p139
      %p141 = scmp.ne.s32.totalorder %s132, %s133
      %p142 = scmp.eq.s32.totalorder %s26, 0
      %p143 = por %p141, %p142
      %p144 = scmp.ne.s32.totalorder %s132, %s133
      %p145 = scmp.eq.s32.totalorder %s27, 1
      %p146 = por %p144, %p145
      %p148 = scmp.ne.s32.totalorder %s133, %s147
      %p149 = scmp.eq.s32.totalorder %s27, 0
      %p150 = por %p148, %p149
      %s151 = ssub.s32 %s29, %s36
      %p152 = scmp.eq.s32.totalorder %s151, 0
      %s154 = sadd.s32 %s153, 1
      %s155 = scalar_select %p152, %s153, %s154
      %p158 = pneg %p152
      %p159 = scmp.eq.s32.totalorder %s21, 1
      %p160 = por %p158, %p159
      %p161 = scmp.ne.s32.totalorder %s153, %s156
      %p162 = scmp.eq.s32.totalorder %s21, 0
      %p163 = por %p161, %p162
      %p164 = scmp.ne.s32.totalorder %s153, %s156
      %p165 = scmp.eq.s32.totalorder %s26, 1
      %p166 = por %p164, %p165
      %p167 = scmp.ne.s32.totalorder %s156, %s157
      %p168 = scmp.eq.s32.totalorder %s26, 0
      %p169 = por %p167, %p168
      %p170 = scmp.ne.s32.totalorder %s156, %s157
      %p171 = scmp.eq.s32.totalorder %s27, 1
      %p172 = por %p170, %p171
      %p174 = scmp.ne.s32.totalorder %s157, %s173
      %p175 = scmp.eq.s32.totalorder %s27, 0
      %p176 = por %p174, %p175
      %s177 = ssub.s32 %s29, %s36
      %p178 = scmp.eq.s32.totalorder %s177, 0
      %s180 = sadd.s32 %s179, 1
      %s181 = scalar_select %p178, %s179, %s180
      %p184 = pneg %p178
      %p185 = scmp.eq.s32.totalorder %s21, 1
      %p186 = por %p184, %p185
      %p187 = scmp.ne.s32.totalorder %s179, %s182
      %p188 = scmp.eq.s32.totalorder %s21, 0
      %p189 = por %p187, %p188
      %p190 = scmp.ne.s32.totalorder %s179, %s182
      %p191 = scmp.eq.s32.totalorder %s26, 1
      %p192 = por %p190, %p191
      %p193 = scmp.ne.s32.totalorder %s182, %s183
      %p194 = scmp.eq.s32.totalorder %s26, 0
      %p195 = por %p193, %p194
      %p196 = scmp.ne.s32.totalorder %s182, %s183
      %p197 = scmp.eq.s32.totalorder %s27, 1
      %p198 = por %p196, %p197
      %p200 = scmp.ne.s32.totalorder %s183, %s199
      %p201 = scmp.eq.s32.totalorder %s27, 0
      %p202 = por %p200, %p201
      %s203 = ssub.s32 %s28, %s40
      %s204 = ssub.s32 %s29, %s36
      %s205 = sor.u32 %s203, %s204
      %p206 = scmp.eq.s32.totalorder %s205, 0
      %s208 = sadd.s32 %s207, 1
      %s209 = scalar_select %p206, %s207, %s208
      %p212 = pneg %p206
      %p213 = scmp.eq.s32.totalorder %s21, 1
      %p214 = por %p212, %p213
      %p215 = scmp.ne.s32.totalorder %s207, %s210
      %p216 = scmp.eq.s32.totalorder %s21, 0
      %p217 = por %p215, %p216
      %p218 = scmp.ne.s32.totalorder %s207, %s210
      %p219 = scmp.eq.s32.totalorder %s26, 1
      %p220 = por %p218, %p219
      %p221 = scmp.ne.s32.totalorder %s210, %s211
      %p222 = scmp.eq.s32.totalorder %s26, 0
      %p223 = por %p221, %p222
      %p224 = scmp.ne.s32.totalorder %s210, %s211
      %p225 = scmp.eq.s32.totalorder %s27, 1
      %p226 = por %p224, %p225
      %p228 = scmp.ne.s32.totalorder %s211, %s227
      %p229 = scmp.eq.s32.totalorder %s27, 0
      %p230 = por %p228, %p229
      %p231 = scmp.le.s32.totalorder 1, %s21
      %p232 = scmp.lt.s32.totalorder %s21, 3
      %p233 = pnand %p231, %p232
      %p234 = pneg %p233
      // Predicated region
      $region9: #{tpu_custom_call.1} parent=5 // pred_check
        _
      $region10: #{tpu_custom_call.1} parent=5 // pred_check_branch
        %236 = sbr.rel (%p233) target = $region12
      $region11: #{tpu_custom_call.1} parent=5 // pred_region
        %s237 = ssub.s32 %s21, 1
        // Predicated region
        $region13: #{tpu_custom_call.1} parent=11 // pred_check
          %p238 = pneg %p59
        $region14: #{tpu_custom_call.1} parent=11 // pred_check_branch
          %240 = sbr.rel (%p238) target = $region16
        $region15: #{tpu_custom_call.1} parent=11 // pred_region
          %s242 = ssub.s32 128, 128
          %243 = vsyncadd [#allocation3], %s242
          %s244 = smul.addr %s30, 2
          %s245 = smul.addr %s244, 64
          %s246 = scalar_lea.hbm %s0, %s245
          %s248 = sshll.u32 [#allocation2], 4
          %s249 = int_to_ptr.vmem [resolvable:$true] %s248
          %251 = dma.hbm_to_vmem [thread:$0]  %s246, 128, %s249, [#allocation3]
        $region16: #{tpu_custom_call.1} parent=11 // pred_fallthru
          _
        // Predicated region
        $region17: #{tpu_custom_call.1} parent=11 // pred_check
          %p252 = pneg %p80
        $region18: #{tpu_custom_call.1} parent=11 // pred_check_branch
          %254 = sbr.rel (%p252) target = $region20
        $region19: #{tpu_custom_call.1} parent=11 // pred_region
          %s256 = ssub.s32 4096, 4096
          %257 = vsyncadd [#allocation6], %s256
          %s258 = sshll.u32 [#allocation5], 4
          %s259 = int_to_ptr.vmem [resolvable:$true] %s258
          %264 = dma.hbm_to_vmem [thread:$0]  %s1, 4096, %s259, [#allocation6], 128, 128, 8
        $region20: #{tpu_custom_call.1} parent=11 // pred_fallthru
          _
        // Predicated region
        $region21: #{tpu_custom_call.1} parent=11 // pred_check
          %p265 = pneg %p101
        $region22: #{tpu_custom_call.1} parent=11 // pred_check_branch
          %267 = sbr.rel (%p265) target = $region24
        $region23: #{tpu_custom_call.1} parent=11 // pred_region
          _
        $region24: #{tpu_custom_call.1} parent=11 // pred_fallthru
          _
        // Predicated region
        $region25: #{tpu_custom_call.1} parent=11 // pred_check
          %p268 = pneg %p122
        $region26: #{tpu_custom_call.1} parent=11 // pred_check_branch
          %270 = sbr.rel (%p268) target = $region28
        $region27: #{tpu_custom_call.1} parent=11 // pred_region
          %s272 = ssub.s32 4096, 4096
          %273 = vsyncadd [#allocation6], %s272
          %s274 = sshll.u32 [#allocation7], 4
          %s275 = int_to_ptr.vmem [resolvable:$true] %s274
          %280 = dma.hbm_to_vmem [thread:$0]  %s3, 4096, %s275, [#allocation6], 128, 128, 8
        $region28: #{tpu_custom_call.1} parent=11 // pred_fallthru
          _
        // Predicated region
        $region29: #{tpu_custom_call.1} parent=11 // pred_check
          %p281 = pneg %p143
        $region30: #{tpu_custom_call.1} parent=11 // pred_check_branch
          %283 = sbr.rel (%p281) target = $region32
        $region31: #{tpu_custom_call.1} parent=11 // pred_region
          _
        $region32: #{tpu_custom_call.1} parent=11 // pred_fallthru
          _
      $region12: #{tpu_custom_call.1} parent=5 // pred_fallthru
        _
      %p284 = scmp.lt.s32.totalorder %s21, 2
      // Predicated region
      $region33: #{tpu_custom_call.1} parent=5 // pred_check
        %p285 = pneg %p284
      $region34: #{tpu_custom_call.1} parent=5 // pred_check_branch
        %287 = sbr.rel (%p285) target = $region36
      $region35: #{tpu_custom_call.1} parent=5 // pred_region
        // Predicated region
        $region37: #{tpu_custom_call.1} parent=35 // pred_check
          %p288 = pneg %p163
        $region38: #{tpu_custom_call.1} parent=35 // pred_check_branch
          %290 = sbr.rel (%p288) target = $region40
        $region39: #{tpu_custom_call.1} parent=35 // pred_region
          %s291 = sand.u32 %s153, 1
          %s292 = scalar_lea.sflag [#allocation9], %s291
          %s293 = sand.u32 %s153, 1
          %s294 = smul.addr %s293, 128
          %s295 = scalar_lea.vmem [#allocation8], %s294
          %s297 = ssub.s32 2048, 2048
          %298 = vsyncadd %s292, %s297
          %s299 = smul.addr %s29, 64
          %s300 = scalar_lea.hbm %s5, %s299
          %s301 = sshll.u32 %s295, 4
          %s302 = int_to_ptr.vmem [resolvable:$true] %s301
          %307 = dma.hbm_to_vmem [thread:$0]  %s300, 2048, %s302, %s292, 128, 64, 4
        $region40: #{tpu_custom_call.1} parent=35 // pred_fallthru
          _
        // Predicated region
        $region41: #{tpu_custom_call.1} parent=35 // pred_check
          %p308 = pneg %p189
        $region42: #{tpu_custom_call.1} parent=35 // pred_check_branch
          %310 = sbr.rel (%p308) target = $region44
        $region43: #{tpu_custom_call.1} parent=35 // pred_region
          %p311 = scmp.lt.s32.totalorder %s29, 1
          %s312 = scalar_select %p311, %s29, 1
          %s313 = scalar_lea.vmem %s6, %s312
        $region44: #{tpu_custom_call.1} parent=35 // pred_fallthru
          _
      $region36: #{tpu_custom_call.1} parent=5 // pred_fallthru
        _
      %p314 = scmp.le.s32.totalorder 1, %s21
      %p315 = scmp.lt.s32.totalorder %s21, 3
      %p316 = pnand %p314, %p315
      %p317 = pneg %p316
      // Predicated region
      $region45: #{tpu_custom_call.1} parent=5 // pred_check
        _
      $region46: #{tpu_custom_call.1} parent=5 // pred_check_branch
        %319 = sbr.rel (%p316) target = $region48
      $region47: #{tpu_custom_call.1} parent=5 // pred_region
        %s320 = ssub.s32 %s21, 1
        // Predicated region
        $region49: #{tpu_custom_call.1} parent=47 // pred_check
          %p321 = pneg %p59
        $region50: #{tpu_custom_call.1} parent=47 // pred_check_branch
          %323 = sbr.rel (%p321) target = $region52
        $region51: #{tpu_custom_call.1} parent=47 // pred_region
          %324 = dma.done [#allocation3], 128
        $region52: #{tpu_custom_call.1} parent=47 // pred_fallthru
          _
        // Predicated region
        $region53: #{tpu_custom_call.1} parent=47 // pred_check
          %p325 = pneg %p80
        $region54: #{tpu_custom_call.1} parent=47 // pred_check_branch
          %327 = sbr.rel (%p325) target = $region56
        $region55: #{tpu_custom_call.1} parent=47 // pred_region
          %328 = dma.done [#allocation6], 4096
        $region56: #{tpu_custom_call.1} parent=47 // pred_fallthru
          _
        // Predicated region
        $region57: #{tpu_custom_call.1} parent=47 // pred_check
          %p329 = pneg %p122
        $region58: #{tpu_custom_call.1} parent=47 // pred_check_branch
          %331 = sbr.rel (%p329) target = $region60
        $region59: #{tpu_custom_call.1} parent=47 // pred_region
          %332 = dma.done [#allocation6], 4096
        $region60: #{tpu_custom_call.1} parent=47 // pred_fallthru
          _
        %s333 = sand.u32 %s156, 1
        %s334 = scalar_lea.sflag [#allocation9], %s333
        %s335 = sand.u32 %s156, 1
        %s336 = smul.addr %s335, 128
        %s337 = scalar_lea.vmem [#allocation8], %s336
        // Predicated region
        $region61: #{tpu_custom_call.1} parent=47 // pred_check
          %p338 = pneg %p169
        $region62: #{tpu_custom_call.1} parent=47 // pred_check_branch
          %340 = sbr.rel (%p338) target = $region64
        $region63: #{tpu_custom_call.1} parent=47 // pred_region
          %341 = dma.done %s334, 2048
        $region64: #{tpu_custom_call.1} parent=47 // pred_fallthru
          _
        %p342 = pneg %p59
        %p343 = pneg %p56
        %p344 = pneg %p80
        %p345 = pneg %p77
        %p346 = pneg %p101
        %p347 = pneg %p98
        %p348 = pneg %p122
        %p349 = pneg %p119
        %p350 = pneg %p143
        %p351 = pneg %p140
        %s352 = sand.u32 %s156, 1
        %s353 = scalar_lea.sflag [#allocation9], %s352
        %s354 = sand.u32 %s156, 1
        %s355 = smul.addr %s354, 128
        %s356 = scalar_lea.vmem [#allocation8], %s355
        %p357 = pneg %p169
        %p358 = pneg %p166
        %p359 = scmp.lt.s32.totalorder %s31, 1
        %s360 = scalar_select %p359, %s31, 1
        %s361 = scalar_lea.vmem %s6, %s360
        %p362 = pneg %p195
        %p363 = pneg %p192
        %p364 = pneg %p223
        %p365 = pneg %p220
        %s366 = sand.u32 %s210, 1
        %s367 = scalar_lea.sflag [#allocation4], %s366
        %s368 = sand.u32 %s210, 1
        %s369 = smul.addr %s368, 8
        %s370 = scalar_lea.vmem [#allocation10], %s369
        %p371 = scmp.lt.s32.totalorder %s31, 1
        %s372 = scalar_select %p371, %s31, 1
        %s373 = scalar_lea.vmem %s6, %s372
        %v375 = vld [vmem:[#allocation2] sm:$0xff]
        %v376 = vld [vmem:[#allocation5] sm:$0xff]
        %v377 = vld [vmem:[#allocation5 + $0x8] sm:$0xff]
        %v378 = vld [vmem:[#allocation5 + $0x10] sm:$0xff]
        %v379 = vld [vmem:[#allocation5 + $0x18] sm:$0xff]
        %v380 = vld [vmem:[#allocation5 + $0x20] sm:$0xff]
        %v381 = vld [vmem:[#allocation5 + $0x28] sm:$0xff]
        %v382 = vld [vmem:[#allocation5 + $0x30] sm:$0xff]
        %v383 = vld [vmem:[#allocation5 + $0x38] sm:$0xff]
        %v384 = vld [vmem:[#allocation5 + $0x40] sm:$0xff]
        %v385 = vld [vmem:[#allocation5 + $0x48] sm:$0xff]
        %v386 = vld [vmem:[#allocation5 + $0x50] sm:$0xff]
        %v387 = vld [vmem:[#allocation5 + $0x58] sm:$0xff]
        %v388 = vld [vmem:[#allocation5 + $0x60] sm:$0xff]
        %v389 = vld [vmem:[#allocation5 + $0x68] sm:$0xff]
        %v390 = vld [vmem:[#allocation5 + $0x70] sm:$0xff]
        %v391 = vld [vmem:[#allocation5 + $0x78] sm:$0xff]
        %v392 = vld [vmem:[#allocation5 + $0x80] sm:$0xff]
        %v393 = vld [vmem:[#allocation5 + $0x88] sm:$0xff]
        %v394 = vld [vmem:[#allocation5 + $0x90] sm:$0xff]
        %v395 = vld [vmem:[#allocation5 + $0x98] sm:$0xff]
        %v396 = vld [vmem:[#allocation5 + $0xa0] sm:$0xff]
        %v397 = vld [vmem:[#allocation5 + $0xa8] sm:$0xff]
        %v398 = vld [vmem:[#allocation5 + $0xb0] sm:$0xff]
        %v399 = vld [vmem:[#allocation5 + $0xb8] sm:$0xff]
        %v400 = vld [vmem:[#allocation5 + $0xc0] sm:$0xff]
        %v401 = vld [vmem:[#allocation5 + $0xc8] sm:$0xff]
        %v402 = vld [vmem:[#allocation5 + $0xd0] sm:$0xff]
        %v403 = vld [vmem:[#allocation5 + $0xd8] sm:$0xff]
        %v404 = vld [vmem:[#allocation5 + $0xe0] sm:$0xff]
        %v405 = vld [vmem:[#allocation5 + $0xe8] sm:$0xff]
        %v406 = vld [vmem:[#allocation5 + $0xf0] sm:$0xff]
        %v407 = vld [vmem:[#allocation5 + $0xf8] sm:$0xff]
        %v408 = vld [vmem:[%s2] sm:$0x3]
        %v410 = vlaneseq
        %v411 = vshrl.u32 %v410, 7
        %v412 = vsub.s32 0, %v411
        %v413 = vrot.slane %v408, %v412
        %v414 = vlaneseq
        %v415 = vshrl.u32 %v414, 7
        %v416 = vsub.s32 1, %v415
        %v417 = vrot.slane %v408, %v416
        %v421 = vunpack.c.l.b16 %v375
        %v422 = vunpack.c.h.b16 %v375
        %v423 = vpack.c.b16 %v421, %v421
        %v424 = vpack.c.b16 %v422, %v422
        %v459 = vunpack.c.l.b16 %v376
        %v460 = vunpack.c.h.b16 %v376
        %v461 = vunpack.c.l.b16 %v377
        %v462 = vunpack.c.h.b16 %v377
        %v463 = vunpack.c.l.b16 %v378
        %v464 = vunpack.c.h.b16 %v378
        %v465 = vunpack.c.l.b16 %v379
        %v466 = vunpack.c.h.b16 %v379
        %v467 = vunpack.c.l.b16 %v380
        %v468 = vunpack.c.h.b16 %v380
        %v469 = vunpack.c.l.b16 %v381
        %v470 = vunpack.c.h.b16 %v381
        %v471 = vunpack.c.l.b16 %v382
        %v472 = vunpack.c.h.b16 %v382
        %v473 = vunpack.c.l.b16 %v383
        %v474 = vunpack.c.h.b16 %v383
        %v475 = vunpack.c.l.b16 %v384
        %v476 = vunpack.c.h.b16 %v384
        %v477 = vunpack.c.l.b16 %v385
        %v478 = vunpack.c.h.b16 %v385
        %v479 = vunpack.c.l.b16 %v386
        %v480 = vunpack.c.h.b16 %v386
        %v481 = vunpack.c.l.b16 %v387
        %v482 = vunpack.c.h.b16 %v387
        %v483 = vunpack.c.l.b16 %v388
        %v484 = vunpack.c.h.b16 %v388
        %v485 = vunpack.c.l.b16 %v389
        %v486 = vunpack.c.h.b16 %v389
        %v487 = vunpack.c.l.b16 %v390
        %v488 = vunpack.c.h.b16 %v390
        %v489 = vunpack.c.l.b16 %v391
        %v490 = vunpack.c.h.b16 %v391
        %v491 = vunpack.c.l.b16 %v392
        %v492 = vunpack.c.h.b16 %v392
        %v493 = vunpack.c.l.b16 %v393
        %v494 = vunpack.c.h.b16 %v393
        %v495 = vunpack.c.l.b16 %v394
        %v496 = vunpack.c.h.b16 %v394
        %v497 = vunpack.c.l.b16 %v395
        %v498 = vunpack.c.h.b16 %v395
        %v499 = vunpack.c.l.b16 %v396
        %v500 = vunpack.c.h.b16 %v396
        %v501 = vunpack.c.l.b16 %v397
        %v502 = vunpack.c.h.b16 %v397
        %v503 = vunpack.c.l.b16 %v398
        %v504 = vunpack.c.h.b16 %v398
        %v505 = vunpack.c.l.b16 %v399
        %v506 = vunpack.c.h.b16 %v399
        %v507 = vunpack.c.l.b16 %v400
        %v508 = vunpack.c.h.b16 %v400
        %v509 = vunpack.c.l.b16 %v401
        %v510 = vunpack.c.h.b16 %v401
        %v511 = vunpack.c.l.b16 %v402
        %v512 = vunpack.c.h.b16 %v402
        %v513 = vunpack.c.l.b16 %v403
        %v514 = vunpack.c.h.b16 %v403
        %v515 = vunpack.c.l.b16 %v404
        %v516 = vunpack.c.h.b16 %v404
        %v517 = vunpack.c.l.b16 %v405
        %v518 = vunpack.c.h.b16 %v405
        %v519 = vunpack.c.l.b16 %v406
        %v520 = vunpack.c.h.b16 %v406
        %v521 = vunpack.c.l.b16 %v407
        %v522 = vunpack.c.h.b16 %v407
        %v523 = vpack.c.b16 %v461, %v459
        %v524 = vpack.c.b16 %v462, %v460
        %v525 = vpack.c.b16 %v465, %v463
        %v526 = vpack.c.b16 %v466, %v464
        %v527 = vpack.c.b16 %v469, %v467
        %v528 = vpack.c.b16 %v470, %v468
        %v529 = vpack.c.b16 %v473, %v471
        %v530 = vpack.c.b16 %v474, %v472
        %v531 = vpack.c.b16 %v477, %v475
        %v532 = vpack.c.b16 %v478, %v476
        %v533 = vpack.c.b16 %v481, %v479
        %v534 = vpack.c.b16 %v482, %v480
        %v535 = vpack.c.b16 %v485, %v483
        %v536 = vpack.c.b16 %v486, %v484
        %v537 = vpack.c.b16 %v489, %v487
        %v538 = vpack.c.b16 %v490, %v488
        %v539 = vpack.c.b16 %v493, %v491
        %v540 = vpack.c.b16 %v494, %v492
        %v541 = vpack.c.b16 %v497, %v495
        %v542 = vpack.c.b16 %v498, %v496
        %v543 = vpack.c.b16 %v501, %v499
        %v544 = vpack.c.b16 %v502, %v500
        %v545 = vpack.c.b16 %v505, %v503
        %v546 = vpack.c.b16 %v506, %v504
        %v547 = vpack.c.b16 %v509, %v507
        %v548 = vpack.c.b16 %v510, %v508
        %v549 = vpack.c.b16 %v513, %v511
        %v550 = vpack.c.b16 %v514, %v512
        %v551 = vpack.c.b16 %v517, %v515
        %v552 = vpack.c.b16 %v518, %v516
        %v553 = vpack.c.b16 %v521, %v519
        %v554 = vpack.c.b16 %v522, %v520
        %587 = vmatprep.subr.bf16.mxu0 %v524
        %588 = vmatpush1.bf16.msra.mxu0 %v523
        %589 = vmatprep.subr.bf16.mxu0 %v526
        %590 = vmatpush1.bf16.msra.mxu0 %v525
        %591 = vmatprep.subr.bf16.mxu0 %v528
        %592 = vmatpush1.bf16.msra.mxu0 %v527
        %593 = vmatprep.subr.bf16.mxu0 %v530
        %594 = vmatpush1.bf16.msra.mxu0 %v529
        %595 = vmatprep.subr.bf16.mxu0 %v532
        %596 = vmatpush1.bf16.msra.mxu0 %v531
        %597 = vmatprep.subr.bf16.mxu0 %v534
        %598 = vmatpush1.bf16.msra.mxu0 %v533
        %599 = vmatprep.subr.bf16.mxu0 %v536
        %600 = vmatpush1.bf16.msra.mxu0 %v535
        %601 = vmatprep.subr.bf16.mxu0 %v538
        %602 = vmatpush1.bf16.msra.mxu0 %v537
        %603 = vmatprep.subr.bf16.mxu0 %v540
        %604 = vmatpush1.bf16.msra.mxu0 %v539
        %605 = vmatprep.subr.bf16.mxu0 %v542
        %606 = vmatpush1.bf16.msra.mxu0 %v541
        %607 = vmatprep.subr.bf16.mxu0 %v544
        %608 = vmatpush1.bf16.msra.mxu0 %v543
        %609 = vmatprep.subr.bf16.mxu0 %v546
        %610 = vmatpush1.bf16.msra.mxu0 %v545
        %611 = vmatprep.subr.bf16.mxu0 %v548
        %612 = vmatpush1.bf16.msra.mxu0 %v547
        %613 = vmatprep.subr.bf16.mxu0 %v550
        %614 = vmatpush1.bf16.msra.mxu0 %v549
        %615 = vmatprep.subr.bf16.mxu0 %v552
        %616 = vmatpush1.bf16.msra.mxu0 %v551
        %617 = vmatprep.subr.bf16.mxu0 %v554
        %618 = vmatpush1.bf16.msra.mxu0 %v553
        %619 = vmatprep.mubr.bf16.mxu0 %v424
        %620 = vmatmul.mubr.bf16.gmra.mrb[0].mxu0 %v423
        %v621 = vpop.f32.mrb[0].mxu0
        %v622 = vadd.f32 %v413, %v621
        %v623 = vpop.f32.mrb[0].mxu0
        %v624 = vadd.f32 %v417, %v623
        %v625 = vpop.f32.mrb[0].mxu0
        %v626 = vpop.f32.mrb[0].mxu0
        %627 = vdwg.mxu0
        %v628 = vmax.f32 %v622, 0.0
        %v629 = vmax.f32 %v624, 0.0
        %v630 = vpack.c.bf16 %v628, %v628
        %v631 = vpack.c.bf16 %v629, %v629
        %v632 = vld [vmem:[#allocation7] sm:$0xff]
        %v633 = vld [vmem:[#allocation7 + $0x8] sm:$0xff]
        %v634 = vld [vmem:[#allocation7 + $0x10] sm:$0xff]
        %v635 = vld [vmem:[#allocation7 + $0x18] sm:$0xff]
        %v636 = vld [vmem:[#allocation7 + $0x20] sm:$0xff]
        %v637 = vld [vmem:[#allocation7 + $0x28] sm:$0xff]
        %v638 = vld [vmem:[#allocation7 + $0x30] sm:$0xff]
        %v639 = vld [vmem:[#allocation7 + $0x38] sm:$0xff]
        %v640 = vld [vmem:[#allocation7 + $0x40] sm:$0xff]
        %v641 = vld [vmem:[#allocation7 + $0x48] sm:$0xff]
        %v642 = vld [vmem:[#allocation7 + $0x50] sm:$0xff]
        %v643 = vld [vmem:[#allocation7 + $0x58] sm:$0xff]
        %v644 = vld [vmem:[#allocation7 + $0x60] sm:$0xff]
        %v645 = vld [vmem:[#allocation7 + $0x68] sm:$0xff]
        %v646 = vld [vmem:[#allocation7 + $0x70] sm:$0xff]
        %v647 = vld [vmem:[#allocation7 + $0x78] sm:$0xff]
        %v648 = vld [vmem:[#allocation7 + $0x80] sm:$0xff]
        %v649 = vld [vmem:[#allocation7 + $0x88] sm:$0xff]
        %v650 = vld [vmem:[#allocation7 + $0x90] sm:$0xff]
        %v651 = vld [vmem:[#allocation7 + $0x98] sm:$0xff]
        %v652 = vld [vmem:[#allocation7 + $0xa0] sm:$0xff]
        %v653 = vld [vmem:[#allocation7 + $0xa8] sm:$0xff]
        %v654 = vld [vmem:[#allocation7 + $0xb0] sm:$0xff]
        %v655 = vld [vmem:[#allocation7 + $0xb8] sm:$0xff]
        %v656 = vld [vmem:[#allocation7 + $0xc0] sm:$0xff]
        %v657 = vld [vmem:[#allocation7 + $0xc8] sm:$0xff]
        %v658 = vld [vmem:[#allocation7 + $0xd0] sm:$0xff]
        %v659 = vld [vmem:[#allocation7 + $0xd8] sm:$0xff]
        %v660 = vld [vmem:[#allocation7 + $0xe0] sm:$0xff]
        %v661 = vld [vmem:[#allocation7 + $0xe8] sm:$0xff]
        %v662 = vld [vmem:[#allocation7 + $0xf0] sm:$0xff]
        %v663 = vld [vmem:[#allocation7 + $0xf8] sm:$0xff]
        %v664 = vld [vmem:[%s4] sm:$0x3]
        %v666 = vlaneseq
        %v667 = vshrl.u32 %v666, 7
        %v668 = vsub.s32 0, %v667
        %v669 = vrot.slane %v664, %v668
        %v670 = vlaneseq
        %v671 = vshrl.u32 %v670, 7
        %v672 = vsub.s32 1, %v671
        %v673 = vrot.slane %v664, %v672
        %v708 = vunpack.c.l.b16 %v632
        %v709 = vunpack.c.h.b16 %v632
        %v710 = vunpack.c.l.b16 %v633
        %v711 = vunpack.c.h.b16 %v633
        %v712 = vunpack.c.l.b16 %v634
        %v713 = vunpack.c.h.b16 %v634
        %v714 = vunpack.c.l.b16 %v635
        %v715 = vunpack.c.h.b16 %v635
        %v716 = vunpack.c.l.b16 %v636
        %v717 = vunpack.c.h.b16 %v636
        %v718 = vunpack.c.l.b16 %v637
        %v719 = vunpack.c.h.b16 %v637
        %v720 = vunpack.c.l.b16 %v638
        %v721 = vunpack.c.h.b16 %v638
        %v722 = vunpack.c.l.b16 %v639
        %v723 = vunpack.c.h.b16 %v639
        %v724 = vunpack.c.l.b16 %v640
        %v725 = vunpack.c.h.b16 %v640
        %v726 = vunpack.c.l.b16 %v641
        %v727 = vunpack.c.h.b16 %v641
        %v728 = vunpack.c.l.b16 %v642
        %v729 = vunpack.c.h.b16 %v642
        %v730 = vunpack.c.l.b16 %v643
        %v731 = vunpack.c.h.b16 %v643
        %v732 = vunpack.c.l.b16 %v644
        %v733 = vunpack.c.h.b16 %v644
        %v734 = vunpack.c.l.b16 %v645
        %v735 = vunpack.c.h.b16 %v645
        %v736 = vunpack.c.l.b16 %v646
        %v737 = vunpack.c.h.b16 %v646
        %v738 = vunpack.c.l.b16 %v647
        %v739 = vunpack.c.h.b16 %v647
        %v740 = vunpack.c.l.b16 %v648
        %v741 = vunpack.c.h.b16 %v648
        %v742 = vunpack.c.l.b16 %v649
        %v743 = vunpack.c.h.b16 %v649
        %v744 = vunpack.c.l.b16 %v650
        %v745 = vunpack.c.h.b16 %v650
        %v746 = vunpack.c.l.b16 %v651
        %v747 = vunpack.c.h.b16 %v651
        %v748 = vunpack.c.l.b16 %v652
        %v749 = vunpack.c.h.b16 %v652
        %v750 = vunpack.c.l.b16 %v653
        %v751 = vunpack.c.h.b16 %v653
        %v752 = vunpack.c.l.b16 %v654
        %v753 = vunpack.c.h.b16 %v654
        %v754 = vunpack.c.l.b16 %v655
        %v755 = vunpack.c.h.b16 %v655
        %v756 = vunpack.c.l.b16 %v656
        %v757 = vunpack.c.h.b16 %v656
        %v758 = vunpack.c.l.b16 %v657
        %v759 = vunpack.c.h.b16 %v657
        %v760 = vunpack.c.l.b16 %v658
        %v761 = vunpack.c.h.b16 %v658
        %v762 = vunpack.c.l.b16 %v659
        %v763 = vunpack.c.h.b16 %v659
        %v764 = vunpack.c.l.b16 %v660
        %v765 = vunpack.c.h.b16 %v660
        %v766 = vunpack.c.l.b16 %v661
        %v767 = vunpack.c.h.b16 %v661
        %v768 = vunpack.c.l.b16 %v662
        %v769 = vunpack.c.h.b16 %v662
        %v770 = vunpack.c.l.b16 %v663
        %v771 = vunpack.c.h.b16 %v663
        %v772 = vpack.c.b16 %v710, %v708
        %v773 = vpack.c.b16 %v711, %v709
        %v774 = vpack.c.b16 %v714, %v712
        %v775 = vpack.c.b16 %v715, %v713
        %v776 = vpack.c.b16 %v718, %v716
        %v777 = vpack.c.b16 %v719, %v717
        %v778 = vpack.c.b16 %v722, %v720
        %v779 = vpack.c.b16 %v723, %v721
        %v780 = vpack.c.b16 %v726, %v724
        %v781 = vpack.c.b16 %v727, %v725
        %v782 = vpack.c.b16 %v730, %v728
        %v783 = vpack.c.b16 %v731, %v729
        %v784 = vpack.c.b16 %v734, %v732
        %v785 = vpack.c.b16 %v735, %v733
        %v786 = vpack.c.b16 %v738, %v736
        %v787 = vpack.c.b16 %v739, %v737
        %v788 = vpack.c.b16 %v742, %v740
        %v789 = vpack.c.b16 %v743, %v741
        %v790 = vpack.c.b16 %v746, %v744
        %v791 = vpack.c.b16 %v747, %v745
        %v792 = vpack.c.b16 %v750, %v748
        %v793 = vpack.c.b16 %v751, %v749
        %v794 = vpack.c.b16 %v754, %v752
        %v795 = vpack.c.b16 %v755, %v753
        %v796 = vpack.c.b16 %v758, %v756
        %v797 = vpack.c.b16 %v759, %v757
        %v798 = vpack.c.b16 %v762, %v760
        %v799 = vpack.c.b16 %v763, %v761
        %v800 = vpack.c.b16 %v766, %v764
        %v801 = vpack.c.b16 %v767, %v765
        %v802 = vpack.c.b16 %v770, %v768
        %v803 = vpack.c.b16 %v771, %v769
        %836 = vmatprep.subr.bf16.mxu0 %v773
        %837 = vmatpush1.bf16.msra.mxu0 %v772
        %838 = vmatprep.subr.bf16.mxu0 %v775
        %839 = vmatpush1.bf16.msra.mxu0 %v774
        %840 = vmatprep.subr.bf16.mxu0 %v777
        %841 = vmatpush1.bf16.msra.mxu0 %v776
        %842 = vmatprep.subr.bf16.mxu0 %v779
        %843 = vmatpush1.bf16.msra.mxu0 %v778
        %844 = vmatprep.subr.bf16.mxu0 %v781
        %845 = vmatpush1.bf16.msra.mxu0 %v780
        %846 = vmatprep.subr.bf16.mxu0 %v783
        %847 = vmatpush1.bf16.msra.mxu0 %v782
        %848 = vmatprep.subr.bf16.mxu0 %v785
        %849 = vmatpush1.bf16.msra.mxu0 %v784
        %850 = vmatprep.subr.bf16.mxu0 %v787
        %851 = vmatpush1.bf16.msra.mxu0 %v786
        %852 = vmatprep.subr.bf16.mxu0 %v789
        %853 = vmatpush1.bf16.msra.mxu0 %v788
        %854 = vmatprep.subr.bf16.mxu0 %v791
        %855 = vmatpush1.bf16.msra.mxu0 %v790
        %856 = vmatprep.subr.bf16.mxu0 %v793
        %857 = vmatpush1.bf16.msra.mxu0 %v792
        %858 = vmatprep.subr.bf16.mxu0 %v795
        %859 = vmatpush1.bf16.msra.mxu0 %v794
        %860 = vmatprep.subr.bf16.mxu0 %v797
        %861 = vmatpush1.bf16.msra.mxu0 %v796
        %862 = vmatprep.subr.bf16.mxu0 %v799
        %863 = vmatpush1.bf16.msra.mxu0 %v798
        %864 = vmatprep.subr.bf16.mxu0 %v801
        %865 = vmatpush1.bf16.msra.mxu0 %v800
        %866 = vmatprep.subr.bf16.mxu0 %v803
        %867 = vmatpush1.bf16.msra.mxu0 %v802
        %868 = vmatprep.mubr.bf16.mxu0 %v631
        %869 = vmatmul.mubr.bf16.gmra.mrb[0].mxu0 %v630
        %v870 = vpop.f32.mrb[0].mxu0
        %v871 = vadd.f32 %v669, %v870
        %v872 = vpop.f32.mrb[0].mxu0
        %v873 = vadd.f32 %v673, %v872
        %v874 = vpop.f32.mrb[0].mxu0
        %v875 = vpop.f32.mrb[0].mxu0
        %876 = vdwg.mxu0
        %v877 = vmax.f32 %v871, 0.0
        %v878 = vmax.f32 %v873, 0.0
        %v879 = vpack.c.bf16 %v877, %v877
        %v880 = vpack.c.bf16 %v878, %v878
        %v881 = vld [vmem:[%s337] sm:$0xf]
        %v882 = vld [vmem:[%s337 + $0x4] sm:$0xf]
        %v883 = vld [vmem:[%s337 + $0x8] sm:$0xf]
        %v884 = vld [vmem:[%s337 + $0xc] sm:$0xf]
        %v885 = vld [vmem:[%s337 + $0x10] sm:$0xf]
        %v886 = vld [vmem:[%s337 + $0x14] sm:$0xf]
        %v887 = vld [vmem:[%s337 + $0x18] sm:$0xf]
        %v888 = vld [vmem:[%s337 + $0x1c] sm:$0xf]
        %v889 = vld [vmem:[%s337 + $0x20] sm:$0xf]
        %v890 = vld [vmem:[%s337 + $0x24] sm:$0xf]
        %v891 = vld [vmem:[%s337 + $0x28] sm:$0xf]
        %v892 = vld [vmem:[%s337 + $0x2c] sm:$0xf]
        %v893 = vld [vmem:[%s337 + $0x30] sm:$0xf]
        %v894 = vld [vmem:[%s337 + $0x34] sm:$0xf]
        %v895 = vld [vmem:[%s337 + $0x38] sm:$0xf]
        %v896 = vld [vmem:[%s337 + $0x3c] sm:$0xf]
        %v897 = vld [vmem:[%s337 + $0x40] sm:$0xf]
        %v898 = vld [vmem:[%s337 + $0x44] sm:$0xf]
        %v899 = vld [vmem:[%s337 + $0x48] sm:$0xf]
        %v900 = vld [vmem:[%s337 + $0x4c] sm:$0xf]
        %v901 = vld [vmem:[%s337 + $0x50] sm:$0xf]
        %v902 = vld [vmem:[%s337 + $0x54] sm:$0xf]
        %v903 = vld [vmem:[%s337 + $0x58] sm:$0xf]
        %v904 = vld [vmem:[%s337 + $0x5c] sm:$0xf]
        %v905 = vld [vmem:[%s337 + $0x60] sm:$0xf]
        %v906 = vld [vmem:[%s337 + $0x64] sm:$0xf]
        %v907 = vld [vmem:[%s337 + $0x68] sm:$0xf]
        %v908 = vld [vmem:[%s337 + $0x6c] sm:$0xf]
        %v909 = vld [vmem:[%s337 + $0x70] sm:$0xf]
        %v910 = vld [vmem:[%s337 + $0x74] sm:$0xf]
        %v911 = vld [vmem:[%s337 + $0x78] sm:$0xf]
        %v912 = vld [vmem:[%s337 + $0x7c] sm:$0xf]
        %v913 = vld [vmem:[%s373] sm:$0x1]
        %v915 = vlaneseq
        %v916 = vshrl.u32 %v915, 7
        %v917 = vsub.s32 0, %v916
        %v918 = vrot.slane %v913, %v917
        %v952 = vunpack.c.l.b16 %v881
        %v953 = vunpack.c.l.b16 %v882
        %v954 = vunpack.c.l.b16 %v883
        %v955 = vunpack.c.l.b16 %v884
        %v956 = vunpack.c.l.b16 %v885
        %v957 = vunpack.c.l.b16 %v886
        %v958 = vunpack.c.l.b16 %v887
        %v959 = vunpack.c.l.b16 %v888
        %v960 = vunpack.c.l.b16 %v889
        %v961 = vunpack.c.l.b16 %v890
        %v962 = vunpack.c.l.b16 %v891
        %v963 = vunpack.c.l.b16 %v892
        %v964 = vunpack.c.l.b16 %v893
        %v965 = vunpack.c.l.b16 %v894
        %v966 = vunpack.c.l.b16 %v895
        %v967 = vunpack.c.l.b16 %v896
        %v968 = vunpack.c.l.b16 %v897
        %v969 = vunpack.c.l.b16 %v898
        %v970 = vunpack.c.l.b16 %v899
        %v971 = vunpack.c.l.b16 %v900
        %v972 = vunpack.c.l.b16 %v901
        %v973 = vunpack.c.l.b16 %v902
        %v974 = vunpack.c.l.b16 %v903
        %v975 = vunpack.c.l.b16 %v904
        %v976 = vunpack.c.l.b16 %v905
        %v977 = vunpack.c.l.b16 %v906
        %v978 = vunpack.c.l.b16 %v907
        %v979 = vunpack.c.l.b16 %v908
        %v980 = vunpack.c.l.b16 %v909
        %v981 = vunpack.c.l.b16 %v910
        %v982 = vunpack.c.l.b16 %v911
        %v983 = vunpack.c.l.b16 %v912
        %v984 = vpack.c.b16 %v953, %v952
        %v985 = vpack.c.b16 %v955, %v954
        %v986 = vpack.c.b16 %v957, %v956
        %v987 = vpack.c.b16 %v959, %v958
        %v988 = vpack.c.b16 %v961, %v960
        %v989 = vpack.c.b16 %v963, %v962
        %v990 = vpack.c.b16 %v965, %v964
        %v991 = vpack.c.b16 %v967, %v966
        %v992 = vpack.c.b16 %v969, %v968
        %v993 = vpack.c.b16 %v971, %v970
        %v994 = vpack.c.b16 %v973, %v972
        %v995 = vpack.c.b16 %v975, %v974
        %v996 = vpack.c.b16 %v977, %v976
        %v997 = vpack.c.b16 %v979, %v978
        %v998 = vpack.c.b16 %v981, %v980
        %v999 = vpack.c.b16 %v983, %v982
        %1016 = vmatprep.subr.bf16.mxu0 0
        %1017 = vmatpush1.bf16.msra.mxu0 %v984
        %1018 = vmatprep.subr.bf16.mxu0 0
        %1019 = vmatpush1.bf16.msra.mxu0 %v985
        %1020 = vmatprep.subr.bf16.mxu0 0
        %1021 = vmatpush1.bf16.msra.mxu0 %v986
        %1022 = vmatprep.subr.bf16.mxu0 0
        %1023 = vmatpush1.bf16.msra.mxu0 %v987
        %1024 = vmatprep.subr.bf16.mxu0 0
        %1025 = vmatpush1.bf16.msra.mxu0 %v988
        %1026 = vmatprep.subr.bf16.mxu0 0
        %1027 = vmatpush1.bf16.msra.mxu0 %v989
        %1028 = vmatprep.subr.bf16.mxu0 0
        %1029 = vmatpush1.bf16.msra.mxu0 %v990
        %1030 = vmatprep.subr.bf16.mxu0 0
        %1031 = vmatpush1.bf16.msra.mxu0 %v991
        %1032 = vmatprep.subr.bf16.mxu0 0
        %1033 = vmatpush1.bf16.msra.mxu0 %v992
        %1034 = vmatprep.subr.bf16.mxu0 0
        %1035 = vmatpush1.bf16.msra.mxu0 %v993
        %1036 = vmatprep.subr.bf16.mxu0 0
        %1037 = vmatpush1.bf16.msra.mxu0 %v994
        %1038 = vmatprep.subr.bf16.mxu0 0
        %1039 = vmatpush1.bf16.msra.mxu0 %v995
        %1040 = vmatprep.subr.bf16.mxu0 0
        %1041 = vmatpush1.bf16.msra.mxu0 %v996
        %1042 = vmatprep.subr.bf16.mxu0 0
        %1043 = vmatpush1.bf16.msra.mxu0 %v997
        %1044 = vmatprep.subr.bf16.mxu0 0
        %1045 = vmatpush1.bf16.msra.mxu0 %v998
        %1046 = vmatprep.subr.bf16.mxu0 0
        %1047 = vmatpush1.bf16.msra.mxu0 %v999
        %1048 = vmatprep.mubr.bf16.mxu0 %v880
        %1049 = vmatmul.mubr.bf16.gmra.mrb[0].mxu0 %v879
        %v1050 = vpop.f32.mrb[0].mxu0
        %v1051 = vadd.f32 %v918, %v1050
        %v1052 = vpop.f32.mrb[0].mxu0
        %v1053 = vpop.f32.mrb[0].mxu0
        %v1054 = vpop.f32.mrb[0].mxu0
        %1055 = vdwg.mxu0
        %1056 = vst [vmem:[%s370] sm:$0xff] %v1051
        %s1057 = sand.u32 %s210, 1
        %s1058 = scalar_lea.sflag [#allocation4], %s1057
        %s1059 = sand.u32 %s210, 1
        %s1060 = smul.addr %s1059, 8
        %s1061 = scalar_lea.vmem [#allocation10], %s1060
        // Predicated region
        $region65: #{tpu_custom_call.1} parent=47 // pred_check
          %p1062 = pneg %p220
        $region66: #{tpu_custom_call.1} parent=47 // pred_check_branch
          %1064 = sbr.rel (%p1062) target = $region68
        $region67: #{tpu_custom_call.1} parent=47 // pred_region
          %s1066 = ssub.s32 128, 128
          %1067 = vsyncadd %s1058, %s1066
          %s1068 = smul.addr %s30, 2
          %s1069 = sadd.s32 %s31, %s1068
          %s1070 = smul.addr %s1069, 128
          %s1071 = scalar_lea.hbm %s7, %s1070
          %s1073 = sshll.u32 %s1061, 4
          %s1074 = int_to_ptr.vmem [resolvable:$true] %s1073
          %1076 = dma.vmem_to_hbm [thread:$0]  %s1074, 128, %s1071, %s1058
        $region68: #{tpu_custom_call.1} parent=47 // pred_fallthru
          _
      $region48: #{tpu_custom_call.1} parent=5 // pred_fallthru
        _
      %p1077 = scmp.le.s32.totalorder 2, %s21
      // Predicated region
      $region69: #{tpu_custom_call.1} parent=5 // pred_check
        %p1078 = pneg %p1077
      $region70: #{tpu_custom_call.1} parent=5 // pred_check_branch
        %1080 = sbr.rel (%p1078) target = $region72
      $region71: #{tpu_custom_call.1} parent=5 // pred_region
        %s1081 = ssub.s32 %s21, 2
        // Predicated region
        $region73: #{tpu_custom_call.1} parent=71 // pred_check
          %p1082 = pneg %p226
        $region74: #{tpu_custom_call.1} parent=71 // pred_check_branch
          %1084 = sbr.rel (%p1082) target = $region76
        $region75: #{tpu_custom_call.1} parent=71 // pred_region
          %s1085 = sand.u32 %s211, 1
          %s1086 = scalar_lea.sflag [#allocation4], %s1085
          %s1087 = sand.u32 %s211, 1
          %s1088 = smul.addr %s1087, 8
          %s1089 = scalar_lea.vmem [#allocation10], %s1088
          %1090 = dma.done %s1086, 128
        $region76: #{tpu_custom_call.1} parent=71 // pred_fallthru
          _
      $region72: #{tpu_custom_call.1} parent=5 // pred_fallthru
        _
    $region6: #{tpu_custom_call.1} parent=1 // loop_footer
      %s25 = sadd.s32 1, %s21
    $region7: #{tpu_custom_call.1} parent=1 // loop_footer_branch
      %20 = sbr.rel target = $region3
    $region8: #{tpu_custom_call.1} parent=1 // loop_exit
      _
    %1091 = vsyncpa [#allocation3], 1
    %s1092 = scalar_lea.sflag [#allocation3], 1
    %1093 = vsyncpa %s1092, 1
    %1094 = vsyncpa [#allocation6], 1
    %1095 = vsyncpa [#allocation9], 1
    %s1096 = scalar_lea.sflag [#allocation9], 1
    %1097 = vsyncpa %s1096, 1
    %1098 = vsyncpa [#allocation4], 1
    %s1099 = scalar_lea.sflag [#allocation4], 1
    %1100 = vsyncpa %s1099, 1

</llo_original>
